<compile_context>
chip_gen: v7x
topology: tpu7x:2x2x1
jax: 0.10.0
libtpu: 0.0.40
codegen_flags: <defaults>
</compile_context>

<pallas_src>
import math

import jax
import jax.numpy as jnp
from jax import lax
from jax.experimental import pallas as pl
from jax.experimental.pallas import tpu as pltpu


_LANE = 128
_HK_MAX = 512  # hidden-dim chunk size (multiple of 8 and 128)


def _mlp_kernel(x_ref, w1_ref, w2_ref, o_ref, acc_ref):
    # One (batch, token-tile, hidden-chunk) grid step.
    #   x_ref : (C, tn)   compute-dtype tile; tokens (H*W) on the lane axis
    #   w1_ref: (Hk, C)   fc1 weight chunk (1x1 conv == channel matmul)
    #   w2_ref: (C, Hk)   fc2 weight chunk
    #   o_ref : (C, tn)   output tile (written on the last hidden chunk)
    #   acc_ref: (C, tn)  f32 accumulator, resident across the hidden axis
    k = pl.program_id(2)

    @pl.when(k == 0)
    def _init():
        acc_ref[...] = jnp.zeros_like(acc_ref)

    # fc1 chunk: native-dtype (bf16) operands straight to the MXU, f32 acc.
    h = jnp.dot(w1_ref[...], x_ref[...],
                preferred_element_type=jnp.float32)            # (Hk, tn) f32

    # Exact GELU (torch.nn.GELU default): 0.5*x*(1+erf(x/sqrt(2))), in f32.
    # (Optional v6e/v7x micro-opt: bf16 elementwise math or tanh-approx GELU
    #  would cut VALU cost; kept f32-erf to match PyTorch numerics exactly.)
    inv_sqrt2 = jnp.float32(0.7071067811865476)
    h = jnp.float32(0.5) * h * (jnp.float32(1.0) + lax.erf(h * inv_sqrt2))

    # Dropout(p=0) is identity -> no-op.

    # fc2 chunk: cast the f32 activation chunk to the weight dtype so bf16
    # weights take the MXU fast path; accumulate in f32 in VMEM scratch.
    acc_ref[...] += jnp.dot(w2_ref[...], h.astype(w2_ref.dtype),
                            preferred_element_type=jnp.float32)

    @pl.when(k == pl.num_programs(2) - 1)
    def _finalize():
        o_ref[...] = acc_ref[...].astype(o_ref.dtype)


def _tpu_vmem_capacity_bytes():
    try:
        info = pltpu.get_tpu_info()
        cap = getattr(info, "vmem_capacity_bytes", None)
        if cap:
            return int(cap)
    except Exception:
        pass
    return 64 * 1024 * 1024  # conservative (v7x per-TC VMEM)


def mlp_forward(x_nchw, w1_conv, w2_conv, *, tn=None, compute_dtype=jnp.bfloat16):
    """x_nchw: [B, C, H, W]; w1_conv: [hidden, C, 1, 1]; w2_conv: [C, hidden, 1, 1]."""
    B, C, H, W = x_nchw.shape
    hidden = w1_conv.shape[0]
    assert w1_conv.shape == (hidden, C, 1, 1)
    assert w2_conv.shape == (C, hidden, 1, 1)

    out_dtype = x_nchw.dtype

    # 1x1-conv weights are already the channel-major matmul operands; cast
    # everything to the MXU-native compute dtype (bf16) at the boundary.
    w1 = w1_conv[:, :, 0, 0].astype(compute_dtype)   # (hidden, C)
    w2 = w2_conv[:, :, 0, 0].astype(compute_dtype)   # (C, hidden)

    # NCHW -> (B, C, H*W): a pure reshape, no HBM transpose passes.
    HW = H * W
    x = x_nchw.reshape(B, C, HW).astype(compute_dtype)

    # Pad the token axis only if H*W is not lane-aligned; ragged final token
    # *blocks* are handled by Pallas boundary masking (token columns are
    # independent through both 1x1 matmuls, so masked columns never leak).
    if HW % _LANE != 0:
        HW_pad = pl.cdiv(HW, _LANE) * _LANE
        x = jnp.pad(x, ((0, 0), (0, 0), (0, HW_pad - HW)))
    else:
        HW_pad = HW

    # Hidden-dim chunking: caps the live (Hk, tn) f32 intermediate and makes
    # weight chunks stream (double-buffered) instead of residing whole.
    if hidden <= _HK_MAX:
        Hk, hidden_pad = hidden, hidden
    else:
        Hk = _HK_MAX
        hidden_pad = pl.cdiv(hidden, Hk) * Hk
        if hidden_pad != hidden:
            # Zero-padded rows/cols contribute nothing (gelu(0)=0, zero cols).
            w1 = jnp.pad(w1, ((0, hidden_pad - hidden), (0, 0)))
            w2 = jnp.pad(w2, ((0, 0), (0, hidden_pad - hidden)))
    num_k = hidden_pad // Hk

    # Per-generation token-tile / VMEM-limit selection.
    vmem_cap = _tpu_vmem_capacity_bytes()
    if vmem_cap >= 100 * 1024 * 1024:        # v5e / v6e: 128 MiB VMEM
        tn_default, vmem_limit = 1024, 100 * 1024 * 1024
    else:                                    # v7x: 64 MiB per-TC VMEM
        tn_default, vmem_limit = 512, 48 * 1024 * 1024
    tn = tn_default if tn is None else tn
    tn = max(_LANE, min(tn, HW_pad))
    tn = (tn // _LANE) * _LANE

    csize = jnp.dtype(compute_dtype).itemsize
    osize = jnp.dtype(out_dtype).itemsize

    def _vmem_est(t):
        return (2 * C * t * csize        # x tile, double-buffered
                + 2 * C * t * osize      # out tile, double-buffered
                + 2 * Hk * C * csize     # w1 chunk, double-buffered
                + 2 * C * Hk * csize     # w2 chunk, double-buffered
                + C * t * 4              # f32 accumulator scratch
                + Hk * t * 4)            # f32 GELU intermediate

    # Budget check: keep headroom under the chosen limit.
    while tn > _LANE and _vmem_est(tn) > 0.7 * vmem_limit:
        tn = max(_LANE, (tn // 2 // _LANE) * _LANE)

    grid_n = pl.cdiv(HW_pad, tn)
    # Megacore occupancy (v7x has 2 TCs): ensure >= 2 parallel grid steps.
    if B * grid_n < 2 and HW_pad >= 2 * _LANE:
        tn = max(_LANE, (pl.cdiv(HW_pad, 2) // _LANE) * _LANE)
        grid_n = pl.cdiv(HW_pad, tn)

    grid = (B, grid_n, num_k)

    cost = pl.CostEstimate(
        flops=4 * B * HW * C * hidden,            # two matmuls
        transcendentals=B * HW * hidden,          # erf
        bytes_accessed=(B * C * HW * csize        # x (unpadded, compute dtype)
                        + B * C * HW * osize      # out (output dtype)
                        + 2 * hidden * C * csize  # both weights
                        ),
    )

    out = pl.pallas_call(
        _mlp_kernel,
        out_shape=jax.ShapeDtypeStruct((B, C, HW_pad), out_dtype),
        grid_spec=pltpu.PrefetchScalarGridSpec(
            num_scalar_prefetch=0,
            grid=grid,
            in_specs=[
                # x tile: kernel sees (C, tn); invariant over the hidden axis.
                pl.BlockSpec((None, C, tn), lambda b, i, k: (b, 0, i)),
                # Streaming per-hidden-chunk weight blocks.
                # TODO(synk): when num_k == 1 these blocks are invariant; a
                # pipeline_mode=pl.Buffered(1) hint would halve their VMEM.
                pl.BlockSpec((Hk, C), lambda b, i, k: (k, 0)),
                pl.BlockSpec((C, Hk), lambda b, i, k: (0, k)),
            ],
            out_specs=pl.BlockSpec((None, C, tn), lambda b, i, k: (b, 0, i)),
            scratch_shapes=[pltpu.VMEM((C, tn), jnp.float32)],
        ),
        compiler_params=pltpu.CompilerParams(
            dimension_semantics=("parallel", "parallel", "arbitrary"),
            vmem_limit_bytes=vmem_limit,
        ),
        cost_estimate=cost,
    )(x, w1, w2)

    if HW_pad != HW:
        out = out[:, :, :HW]
    return out.reshape(B, C, H, W)


def _reference(x_nchw, w1_conv, w2_conv, compute_dtype=jnp.bfloat16):
    # f32-math reference of the PyTorch forward with the same operand
    # quantization the kernel uses (bf16 cast at the boundary).
    B, C, H, W = x_nchw.shape
    x = x_nchw.reshape(B, C, H * W).astype(compute_dtype).astype(jnp.float32)
    w1 = w1_conv[:, :, 0, 0].astype(compute_dtype).astype(jnp.float32)
    w2 = w2_conv[:, :, 0, 0].astype(compute_dtype).astype(jnp.float32)
    h = jnp.einsum("hc,bcn->bhn", w1, x, precision=lax.Precision.HIGHEST)
    h = 0.5 * h * (1.0 + lax.erf(h / jnp.float32(math.sqrt(2.0))))
    o = jnp.einsum("ch,bhn->bcn", w2, h, precision=lax.Precision.HIGHEST)
    return o.reshape(B, C, H, W).astype(x_nchw.dtype)


if __name__ == "__main__":
    # Small shapes consistent with the module: NCHW input, 1x1 convs.
    B, C_in, H, W = 2, 4, 16, 16
    hidden = 32

    key = jax.random.PRNGKey(0)
    kx, kw1, kw2 = jax.random.split(key, 3)

    x = jax.random.normal(kx, (B, C_in, H, W), dtype=jnp.float32)
    bound1 = 1.0 / math.sqrt(C_in)
    bound2 = 1.0 / math.sqrt(hidden)
    w1_conv = jax.random.uniform(kw1, (hidden, C_in, 1, 1), jnp.float32,
                                 minval=-bound1, maxval=bound1)
    w2_conv = jax.random.uniform(kw2, (C_in, hidden, 1, 1), jnp.float32,
                                 minval=-bound2, maxval=bound2)

    out = mlp_forward(x, w1_conv, w2_conv)
    out = jax.block_until_ready(out)

    ref = _reference(x, w1_conv, w2_conv)
    assert out.shape == (B, C_in, H, W)
    assert out.dtype == x.dtype
    # bf16 operands + f32 accumulation; tolerance covers the bf16 cast of the
    # GELU output feeding fc2 (the reference uses the same input quantization).
    err = float(jnp.max(jnp.abs(out.astype(jnp.float32) - ref.astype(jnp.float32))))
    assert err < 2e-2, f"mismatch vs reference: max abs err {err}"

    print("KERNEL_OK")
</pallas_src>

<mosaic_0001>
module attributes {stable_mosaic.version = 11 : i64} {
  func.func @_mlp_kernel(%arg0: i32, %arg1: i32, %arg2: i32, %arg3: memref<1x4x256xbf16, #tpu.memory_space<vmem>>, %arg4: memref<32x4xbf16, #tpu.memory_space<vmem>>, %arg5: memref<4x32xbf16, #tpu.memory_space<vmem>>, %arg6: memref<1x4x256xf32, #tpu.memory_space<vmem>>, %arg7: memref<4x256xf32, #tpu.memory_space<vmem>>) attributes {dimension_semantics = [#tpu.dimension_semantics<parallel>, #tpu.dimension_semantics<parallel>, #tpu.dimension_semantics<arbitrary>], iteration_bounds = array<i64: 2, 1, 1>, scalar_prefetch = 0 : i64, scratch_operands = 1 : i64, tpu.core_type = #tpu.core_type<tc>, window_params = [{transform_indices = @transform_0, window_bounds = array<i64: 1, 4, 256>}, {transform_indices = @transform_1, window_bounds = array<i64: 32, 4>}, {transform_indices = @transform_2, window_bounds = array<i64: 4, 32>}, {transform_indices = @transform_3, window_bounds = array<i64: 1, 4, 256>}]} {
    %c0_i32 = arith.constant 0 : i32
    %0 = arith.cmpi eq, %arg2, %c0_i32 : i32
    %1 = arith.extui %0 : i1 to i32
    %c0_i32_0 = arith.constant 0 : i32
    %2 = arith.cmpi ne, %1, %c0_i32_0 : i32
    scf.if %2 {
      %cst_17 = arith.constant 0.000000e+00 : f32
      %24 = vector.broadcast %cst_17 : f32 to vector<4x256xf32>
      %c0_18 = arith.constant 0 : index
      %c0_19 = arith.constant 0 : index
      %25 = vector.load %arg7[%c0_18, %c0_19] : memref<4x256xf32, #tpu.memory_space<vmem>>, vector<4x256xf32>
      tpu.vector_store %arg7[%c0_18, %c0_19], %24 {strides = array<i32>} : memref<4x256xf32, #tpu.memory_space<vmem>>, vector<4x256xf32>,
    } else {
    }
    %c0 = arith.constant 0 : index
    %c0_1 = arith.constant 0 : index
    %3 = vector.load %arg4[%c0, %c0_1] : memref<32x4xbf16, #tpu.memory_space<vmem>>, vector<32x4xbf16>
    %c0_2 = arith.constant 0 : index
    %c0_3 = arith.constant 0 : index
    %c0_4 = arith.constant 0 : index
    %4 = vector.load %arg3[%c0_2, %c0_3, %c0_4] : memref<1x4x256xbf16, #tpu.memory_space<vmem>>, vector<1x4x256xbf16>
    %5 = vector.shape_cast %4 : vector<1x4x256xbf16> to vector<4x256xbf16>
    %cst = arith.constant dense<0.000000e+00> : vector<32x256xf32>
    %6 = tpu.matmul %3, %5, %cst {dimension_numbers = #tpu.dot_dimension_numbers<[1], [0], [0], [1], [0, 0, 1, 1], [], []>} : vector<32x4xbf16>, vector<4x256xbf16>, vector<32x256xf32> -> vector<32x256xf32>
    %cst_5 = arith.constant 5.000000e-01 : f32
    %7 = vector.broadcast %cst_5 : f32 to vector<32x256xf32>
    %8 = arith.mulf %7, %6 : vector<32x256xf32>
    %cst_6 = arith.constant 0.707106769 : f32
    %9 = vector.broadcast %cst_6 : f32 to vector<32x256xf32>
    %10 = arith.mulf %6, %9 : vector<32x256xf32>
    %11 = math.erf %10 : vector<32x256xf32>
    %cst_7 = arith.constant 1.000000e+00 : f32
    %12 = vector.broadcast %cst_7 : f32 to vector<32x256xf32>
    %13 = arith.addf %12, %11 : vector<32x256xf32>
    %14 = arith.mulf %8, %13 : vector<32x256xf32>
    %c0_8 = arith.constant 0 : index
    %c0_9 = arith.constant 0 : index
    %15 = vector.load %arg7[%c0_8, %c0_9] : memref<4x256xf32, #tpu.memory_space<vmem>>, vector<4x256xf32>
    %c0_10 = arith.constant 0 : index
    %c0_11 = arith.constant 0 : index
    %16 = vector.load %arg5[%c0_10, %c0_11] : memref<4x32xbf16, #tpu.memory_space<vmem>>, vector<4x32xbf16>
    %17 = arith.truncf %14 : vector<32x256xf32> to vector<32x256xbf16>
    %cst_12 = arith.constant dense<0.000000e+00> : vector<4x256xf32>
    %18 = tpu.matmul %16, %17, %cst_12 {dimension_numbers = #tpu.dot_dimension_numbers<[1], [0], [0], [1], [0, 0, 1, 1], [], []>} : vector<4x32xbf16>, vector<32x256xbf16>, vector<4x256xf32> -> vector<4x256xf32>
    %19 = arith.addf %15, %18 : vector<4x256xf32>
    %c0_13 = arith.constant 0 : index
    %c0_14 = arith.constant 0 : index
    %20 = vector.load %arg7[%c0_13, %c0_14] : memref<4x256xf32, #tpu.memory_space<vmem>>, vector<4x256xf32>
    tpu.vector_store %arg7[%c0_13, %c0_14], %19 {strides = array<i32>} : memref<4x256xf32, #tpu.memory_space<vmem>>, vector<4x256xf32>,
    %c0_i32_15 = arith.constant 0 : i32
    %21 = arith.cmpi eq, %arg2, %c0_i32_15 : i32
    %22 = arith.extui %21 : i1 to i32
    %c0_i32_16 = arith.constant 0 : i32
    %23 = arith.cmpi ne, %22, %c0_i32_16 : i32
    scf.if %23 {
      %c0_17 = arith.constant 0 : index
      %c0_18 = arith.constant 0 : index
      %24 = vector.load %arg7[%c0_17, %c0_18] : memref<4x256xf32, #tpu.memory_space<vmem>>, vector<4x256xf32>
      %c0_19 = arith.constant 0 : index
      %c0_20 = arith.constant 0 : index
      %c0_21 = arith.constant 0 : index
      %25 = vector.load %arg6[%c0_19, %c0_20, %c0_21] : memref<1x4x256xf32, #tpu.memory_space<vmem>>, vector<1x4x256xf32>
      %26 = vector.shape_cast %25 : vector<1x4x256xf32> to vector<4x256xf32>
      %27 = vector.shape_cast %24 : vector<4x256xf32> to vector<1x4x256xf32>
      tpu.vector_store %arg6[%c0_19, %c0_20, %c0_21], %27 {strides = array<i32>} : memref<1x4x256xf32, #tpu.memory_space<vmem>>, vector<1x4x256xf32>,
    } else {
    }
    return
  }
  func.func @transform_0(%arg0: i32, %arg1: i32, %arg2: i32) -> (i32, i32, i32) {
    %c0_i32 = arith.constant 0 : i32
    %c0_i32_0 = arith.constant 0 : i32
    return %arg0, %c0_i32, %arg1 : i32, i32, i32
  }
  func.func @transform_1(%arg0: i32, %arg1: i32, %arg2: i32) -> (i32, i32) {
    %c0_i32 = arith.constant 0 : i32
    %c0_i32_0 = arith.constant 0 : i32
    return %arg2, %c0_i32 : i32, i32
  }
  func.func @transform_2(%arg0: i32, %arg1: i32, %arg2: i32) -> (i32, i32) {
    %c0_i32 = arith.constant 0 : i32
    %c0_i32_0 = arith.constant 0 : i32
    return %c0_i32, %arg2 : i32, i32
  }
  func.func @transform_3(%arg0: i32, %arg1: i32, %arg2: i32) -> (i32, i32, i32) {
    %c0_i32 = arith.constant 0 : i32
    %c0_i32_0 = arith.constant 0 : i32
    return %arg0, %c0_i32, %arg1 : i32, i32, i32
  }
}

</mosaic_0001>

<llo_original>
// kernel: tpu_custom_call.1
$region0: #{tpu_custom_call.1}
  #allocation0 [shape = 'u32[]', space=smem, size = 0x4, offset = 0x4, fixed_abs, tag = 'smem constant byte address 0x4 - core index']
  #allocation1 [shape = 'u32[144,128]{1,0:T(1,128)}', space=vmem, size = 0x12000, scoped, tag = 'internal scratch']
  #allocation2 [shape = 'f32[4,256]{1,0:T(4,128)}', space=vmem, size = 0x1000, scoped, tag = 'scratch operand']
  %s0 = inlined_call_operand.vmem [shape: bf16[2,4,256], index: 0, kind: input, shape index: {}]
  %s1 = inlined_call_operand.vmem [shape: bf16[32,4], index: 1, kind: input, shape index: {}]
  %s2 = inlined_call_operand.vmem [shape: bf16[4,32], index: 2, kind: input, shape index: {}]
  %s3 = inlined_call_operand.hbm [shape: f32[2,4,256], index: 3, kind: output, shape index: {}]
  %s4 = sld [smem:[#allocation0]]
  $region53: #{tpu_custom_call.1} parent=0
    _
  %s6 = ssub.s32 1, %s4
  %s7 = scalar_select 0, %s6, %s4
  $region1: #{tpu_custom_call.1} parent=0
    #allocation3 [shape = 'u8[8192]{0}', space=vmem, size = 0x2000, scoped, tag = 'output window, operand 0']
    #allocation4 [shape = 's32[2]{0}', space=sflag, size = 0x8, scoped, tag = 'scoped memory for tpu_custom_call.1']
    %8 = vsyncpa [#allocation4], 0
    %s9 = scalar_lea.sflag [#allocation4], 1
    %10 = vsyncpa %s9, 0
    loop: start=0, step=1, limit=4
    $region2: #{tpu_custom_call.1} parent=1 // loop_pre_header
      _
    $region3: #{tpu_custom_call.1} parent=1 // loop_header
      %s12 = sphi 0, %s16
      %p13 = scmp.ge.s32.totalorder %s12, 4
      %s19 = sphi 0, %s38
      %s20 = sphi 0, %s34
      %s21 = sphi 0, %s30
      %s22 = sphi 0, %s19
      %s23 = sphi 0, %s20
      %s24 = sphi 0, %s21
      %s25 = sphi 0, %s22
      %s26 = sphi 0, %s23
      %s27 = sphi 0, %s24
      %s43 = sphi 0, %s45
      %s46 = sphi 0, %s43
      %s47 = sphi 0, %s46
      %s63 = sphi 0, %s47
      %s69 = sphi 0, %s71
      %s72 = sphi 0, %s69
      %s73 = sphi 0, %s72
      %s89 = sphi 0, %s73
      %s95 = sphi 0, %s97
      %s98 = sphi 0, %s95
      %s99 = sphi 0, %s98
      %s115 = sphi 0, %s99
      %s123 = sphi 0, %s125
      %s126 = sphi 0, %s123
      %s127 = sphi 0, %s126
      %s143 = sphi 0, %s127
    $region4: #{tpu_custom_call.1} parent=1 // loop_header_branch
      %15 = sbr.rel (%p13) target = $region8
    $region5: #{tpu_custom_call.1} parent=1 // loop_body
      %s17 = ssub.s32 %s12, 1
      %s18 = ssub.s32 %s12, 2
      %s28 = sadd.s32 1, %s21
      %p29 = scmp.ge.s32.totalorder %s28, 1
      %s30 = scalar_select %p29, 0, %s28
      %s31 = sadd.s32 1, %s20
      %s32 = scalar_select %p29, %s31, %s20
      %p33 = scmp.ge.s32.totalorder %s32, 1
      %s34 = scalar_select %p33, 0, %s32
      %s35 = sadd.s32 1, %s19
      %s36 = scalar_select %p33, %s35, %s19
      %p37 = scmp.ge.s32.totalorder %s36, 2
      %s38 = scalar_select %p37, 0, %s36
      %s39 = ssub.s32 %s19, %s38
      %s40 = ssub.s32 %s20, %s34
      %s41 = sor.u32 %s39, %s40
      %p42 = scmp.eq.s32.totalorder %s41, 0
      %s44 = sadd.s32 %s43, 1
      %s45 = scalar_select %p42, %s43, %s44
      %p48 = pneg %p42
      %p49 = scmp.eq.s32.totalorder %s12, 1
      %p50 = por %p48, %p49
      %p51 = scmp.ne.s32.totalorder %s43, %s46
      %p52 = scmp.eq.s32.totalorder %s12, 0
      %p53 = por %p51, %p52
      %p54 = scmp.ne.s32.totalorder %s43, %s46
      %p55 = scmp.eq.s32.totalorder %s17, 1
      %p56 = por %p54, %p55
      %p57 = scmp.ne.s32.totalorder %s46, %s47
      %p58 = scmp.eq.s32.totalorder %s17, 0
      %p59 = por %p57, %p58
      %p60 = scmp.ne.s32.totalorder %s46, %s47
      %p61 = scmp.eq.s32.totalorder %s18, 1
      %p62 = por %p60, %p61
      %p64 = scmp.ne.s32.totalorder %s47, %s63
      %p65 = scmp.eq.s32.totalorder %s18, 0
      %p66 = por %p64, %p65
      %s67 = ssub.s32 %s21, %s30
      %p68 = scmp.eq.s32.totalorder %s67, 0
      %s70 = sadd.s32 %s69, 1
      %s71 = scalar_select %p68, %s69, %s70
      %p74 = pneg %p68
      %p75 = scmp.eq.s32.totalorder %s12, 1
      %p76 = por %p74, %p75
      %p77 = scmp.ne.s32.totalorder %s69, %s72
      %p78 = scmp.eq.s32.totalorder %s12, 0
      %p79 = por %p77, %p78
      %p80 = scmp.ne.s32.totalorder %s69, %s72
      %p81 = scmp.eq.s32.totalorder %s17, 1
      %p82 = por %p80, %p81
      %p83 = scmp.ne.s32.totalorder %s72, %s73
      %p84 = scmp.eq.s32.totalorder %s17, 0
      %p85 = por %p83, %p84
      %p86 = scmp.ne.s32.totalorder %s72, %s73
      %p87 = scmp.eq.s32.totalorder %s18, 1
      %p88 = por %p86, %p87
      %p90 = scmp.ne.s32.totalorder %s73, %s89
      %p91 = scmp.eq.s32.totalorder %s18, 0
      %p92 = por %p90, %p91
      %s93 = ssub.s32 %s21, %s30
      %p94 = scmp.eq.s32.totalorder %s93, 0
      %s96 = sadd.s32 %s95, 1
      %s97 = scalar_select %p94, %s95, %s96
      %p100 = pneg %p94
      %p101 = scmp.eq.s32.totalorder %s12, 1
      %p102 = por %p100, %p101
      %p103 = scmp.ne.s32.totalorder %s95, %s98
      %p104 = scmp.eq.s32.totalorder %s12, 0
      %p105 = por %p103, %p104
      %p106 = scmp.ne.s32.totalorder %s95, %s98
      %p107 = scmp.eq.s32.totalorder %s17, 1
      %p108 = por %p106, %p107
      %p109 = scmp.ne.s32.totalorder %s98, %s99
      %p110 = scmp.eq.s32.totalorder %s17, 0
      %p111 = por %p109, %p110
      %p112 = scmp.ne.s32.totalorder %s98, %s99
      %p113 = scmp.eq.s32.totalorder %s18, 1
      %p114 = por %p112, %p113
      %p116 = scmp.ne.s32.totalorder %s99, %s115
      %p117 = scmp.eq.s32.totalorder %s18, 0
      %p118 = por %p116, %p117
      %s119 = ssub.s32 %s19, %s38
      %s120 = ssub.s32 %s20, %s34
      %s121 = sor.u32 %s119, %s120
      %p122 = scmp.eq.s32.totalorder %s121, 0
      %s124 = sadd.s32 %s123, 1
      %s125 = scalar_select %p122, %s123, %s124
      %p128 = pneg %p122
      %p129 = scmp.eq.s32.totalorder %s12, 1
      %p130 = por %p128, %p129
      %p131 = scmp.ne.s32.totalorder %s123, %s126
      %p132 = scmp.eq.s32.totalorder %s12, 0
      %p133 = por %p131, %p132
      %p134 = scmp.ne.s32.totalorder %s123, %s126
      %p135 = scmp.eq.s32.totalorder %s17, 1
      %p136 = por %p134, %p135
      %p137 = scmp.ne.s32.totalorder %s126, %s127
      %p138 = scmp.eq.s32.totalorder %s17, 0
      %p139 = por %p137, %p138
      %p140 = scmp.ne.s32.totalorder %s126, %s127
      %p141 = scmp.eq.s32.totalorder %s18, 1
      %p142 = por %p140, %p141
      %p144 = scmp.ne.s32.totalorder %s127, %s143
      %p145 = scmp.eq.s32.totalorder %s18, 0
      %p146 = por %p144, %p145
      %p147 = scmp.le.s32.totalorder 1, %s12
      %p148 = scmp.lt.s32.totalorder %s12, 3
      %p149 = pnand %p147, %p148
      %p150 = pneg %p149
      // Predicated region
      $region9: #{tpu_custom_call.1} parent=5 // pred_check
        _
      $region10: #{tpu_custom_call.1} parent=5 // pred_check_branch
        %152 = sbr.rel (%p149) target = $region12
      $region11: #{tpu_custom_call.1} parent=5 // pred_region
        %s153 = ssub.s32 %s12, 1
        // Predicated region
        $region13: #{tpu_custom_call.1} parent=11 // pred_check
          %p154 = pneg %p85
        $region14: #{tpu_custom_call.1} parent=11 // pred_check_branch
          %156 = sbr.rel (%p154) target = $region16
        $region15: #{tpu_custom_call.1} parent=11 // pred_region
          %s157 = smul.u32 4, %s24
          %p158 = scmp.lt.s32.totalorder %s157, 3
          %s159 = scalar_select %p158, %s157, 3
          %s160 = smul.addr %s159, 4
          %s161 = scalar_lea.vmem %s1, %s160
          %s162 = smul.u32 4, %s24
        $region16: #{tpu_custom_call.1} parent=11 // pred_fallthru
          _
        // Predicated region
        $region17: #{tpu_custom_call.1} parent=11 // pred_check
          %p163 = pneg %p111
        $region18: #{tpu_custom_call.1} parent=11 // pred_check_branch
          %165 = sbr.rel (%p163) target = $region20
        $region19: #{tpu_custom_call.1} parent=11 // pred_region
          %p166 = scmp.lt.s32.totalorder %s24, 0
          %s167 = scalar_select %p166, %s24, 0
          %s168 = smul.addr %s167, 2
          %s169 = scalar_lea.vmem %s2, %s168
        $region20: #{tpu_custom_call.1} parent=11 // pred_fallthru
          _
      $region12: #{tpu_custom_call.1} parent=5 // pred_fallthru
        _
      %p170 = scmp.lt.s32.totalorder %s12, 2
      // Predicated region
      $region21: #{tpu_custom_call.1} parent=5 // pred_check
        %p171 = pneg %p170
      $region22: #{tpu_custom_call.1} parent=5 // pred_check_branch
        %173 = sbr.rel (%p171) target = $region24
      $region23: #{tpu_custom_call.1} parent=5 // pred_region
        // Predicated region
        $region25: #{tpu_custom_call.1} parent=23 // pred_check
          %p174 = pneg %p53
        $region26: #{tpu_custom_call.1} parent=23 // pred_check_branch
          %176 = sbr.rel (%p174) target = $region28
        $region27: #{tpu_custom_call.1} parent=23 // pred_region
          %s177 = smul.u32 2, %s20
          %p178 = scmp.lt.s32.totalorder %s19, 1
          %s179 = scalar_select %p178, %s19, 1
          %p180 = scmp.lt.s32.totalorder %s177, 1
          %s181 = scalar_select %p180, %s177, 1
          %s182 = smul.addr %s179, 2
          %s183 = sadd.s32 %s181, %s182
          %s184 = smul.addr %s183, 2
          %s185 = scalar_lea.vmem %s0, %s184
          %s186 = smul.u32 2, %s20
        $region28: #{tpu_custom_call.1} parent=23 // pred_fallthru
          _
      $region24: #{tpu_custom_call.1} parent=5 // pred_fallthru
        _
      %p187 = scmp.le.s32.totalorder 1, %s12
      %p188 = scmp.lt.s32.totalorder %s12, 3
      %p189 = pnand %p187, %p188
      %p190 = pneg %p189
      // Predicated region
      $region29: #{tpu_custom_call.1} parent=5 // pred_check
        _
      $region30: #{tpu_custom_call.1} parent=5 // pred_check_branch
        %192 = sbr.rel (%p189) target = $region32
      $region31: #{tpu_custom_call.1} parent=5 // pred_region
        %s193 = ssub.s32 %s12, 1
        %s194 = smul.u32 2, %s23
        %p195 = scmp.lt.s32.totalorder %s22, 1
        %s196 = scalar_select %p195, %s22, 1
        %p197 = scmp.lt.s32.totalorder %s194, 1
        %s198 = scalar_select %p197, %s194, 1
        %s199 = smul.addr %s196, 2
        %s200 = sadd.s32 %s198, %s199
        %s201 = smul.addr %s200, 2
        %s202 = scalar_lea.vmem %s0, %s201
        %p203 = pneg %p59
        %p204 = pneg %p56
        %s205 = smul.u32 4, %s24
        %p206 = scmp.lt.s32.totalorder %s205, 3
        %s207 = scalar_select %p206, %s205, 3
        %s208 = smul.addr %s207, 4
        %s209 = scalar_lea.vmem %s1, %s208
        %p210 = pneg %p85
        %p211 = pneg %p82
        %p212 = scmp.lt.s32.totalorder %s24, 0
        %s213 = scalar_select %p212, %s24, 0
        %s214 = smul.addr %s213, 2
        %s215 = scalar_lea.vmem %s2, %s214
        %p216 = pneg %p111
        %p217 = pneg %p108
        %p218 = pneg %p139
        %p219 = pneg %p136
        %s220 = sand.u32 %s126, 1
        %s221 = scalar_lea.sflag [#allocation4], %s220
        %s222 = sand.u32 %s126, 1
        %s223 = smul.addr %s222, 8
        %s224 = scalar_lea.vmem [#allocation3], %s223
        %s225 = smul.u32 2, %s23
        %p226 = scmp.lt.s32.totalorder %s22, 1
        %s227 = scalar_select %p226, %s22, 1
        %p228 = scmp.lt.s32.totalorder %s225, 1
        %s229 = scalar_select %p228, %s225, 1
        %s230 = smul.addr %s227, 2
        %s231 = sadd.s32 %s229, %s230
        %s232 = smul.addr %s231, 2
        %s233 = scalar_lea.vmem %s0, %s232
        %s234 = smul.u32 2, %s23
        %s235 = smul.u32 4, %s24
        %p236 = scmp.lt.s32.totalorder %s235, 3
        %s237 = scalar_select %p236, %s235, 3
        %s238 = smul.addr %s237, 4
        %s239 = scalar_lea.vmem %s1, %s238
        %s240 = smul.u32 4, %s24
        %p241 = scmp.lt.s32.totalorder %s24, 0
        %s242 = scalar_select %p241, %s24, 0
        %s243 = smul.addr %s242, 2
        %s244 = scalar_lea.vmem %s2, %s243
        %s245 = smul.u32 2, %s23
        %p247 = scmp.eq.s32.totalorder %s24, 0
        // Predicated region
        $region33: #{tpu_custom_call.1} parent=31 // pred_check
          %p248 = pneg %p247
        $region34: #{tpu_custom_call.1} parent=31 // pred_check_branch
          %250 = sbr.rel (%p248) target = $region36
        $region35: #{tpu_custom_call.1} parent=31 // pred_region
          %251 = vst [vmem:[#allocation2] sm:$0xff] 0.0
        $region36: #{tpu_custom_call.1} parent=31 // pred_fallthru
          _
        %v252 = vld [vmem:[%s239] sm:$0xf]
        %v253 = vld [vmem:[%s239 + $0x4] sm:$0xf]
        %v254 = vld [vmem:[%s239 + $0x8] sm:$0xf]
        %v255 = vld [vmem:[%s239 + $0xc] sm:$0xf]
        %v256 = vld [vmem:[%s233] sm:$0xf]
        %v261 = vunpack.c.l.b16 %v252
        %v262 = vunpack.c.l.b16 %v253
        %v263 = vunpack.c.l.b16 %v254
        %v264 = vunpack.c.l.b16 %v255
        %v265 = vpack.c.b16 %v262, %v261
        %v266 = vpack.c.b16 %v264, %v263
        %v269 = vunpack.c.l.s4 1983009808
        %v270 = vunpack.c.0.s8 %v269
        %v271 = vlaneseq
        %v272 = vshrl.u32 %v271, 7
        %v273 = vsub.s32 %v270, %v272
        %v274 = vrot.slane %v256, %v273
        %v275 = vcombine.high %v274, %v274
        %vm276 = vcmask 31744
        %v278 = vsel %vm276, %v265, 0
        %v281 = vsel %vm276, %v266, 0
        %vm283 = vcmask 1041408
        %v285 = vsel %vm283, %v274, 0
        %v288 = vsel %vm283, %v275, 0
        %290 = vmatprep.subr.bf16.mxu0 %v288
        %291 = vmatpush1.bf16.msra.mxu0 %v285
        %292 = vmatprep.subr.bf16.mxu0 0
        %293 = vmatpush1.bf16.msra.mxu0 0
        %294 = vmatprep.subr.bf16.mxu0 0
        %295 = vmatpush1.bf16.msra.mxu0 0
        %296 = vmatprep.subr.bf16.mxu0 0
        %297 = vmatpush1.bf16.msra.mxu0 0
        %298 = vmatprep.subr.bf16.mxu0 0
        %299 = vmatpush1.bf16.msra.mxu0 0
        %300 = vmatprep.subr.bf16.mxu0 0
        %301 = vmatpush1.bf16.msra.mxu0 0
        %302 = vmatprep.subr.bf16.mxu0 0
        %303 = vmatpush1.bf16.msra.mxu0 0
        %304 = vmatprep.subr.bf16.mxu0 0
        %305 = vmatpush1.bf16.msra.mxu0 0
        %306 = vmatprep.subr.bf16.mxu0 0
        %307 = vmatpush1.bf16.msra.mxu0 0
        %308 = vmatprep.subr.bf16.mxu0 0
        %309 = vmatpush1.bf16.msra.mxu0 0
        %310 = vmatprep.subr.bf16.mxu0 0
        %311 = vmatpush1.bf16.msra.mxu0 0
        %312 = vmatprep.subr.bf16.mxu0 0
        %313 = vmatpush1.bf16.msra.mxu0 0
        %314 = vmatprep.subr.bf16.mxu0 0
        %315 = vmatpush1.bf16.msra.mxu0 0
        %316 = vmatprep.subr.bf16.mxu0 0
        %317 = vmatpush1.bf16.msra.mxu0 0
        %318 = vmatprep.subr.bf16.mxu0 0
        %319 = vmatpush1.bf16.msra.mxu0 0
        %320 = vmatprep.subr.bf16.mxu0 0
        %321 = vmatpush1.bf16.msra.mxu0 0
        %322 = vmatprep.mubr.bf16.mxu0 0
        %323 = vmatmul.mubr.bf16.gmra.mrb[0].mxu0 %v278
        %v324 = vpop.f32.mrb[0].mxu0
        %v325 = vadd.f32 0.0, %v324
        %v326 = vpop.f32.mrb[0].mxu0
        %v327 = vadd.f32 0.0, %v326
        %v328 = vpop.f32.mrb[0].mxu0
        %v329 = vadd.f32 0.0, %v328
        %v330 = vpop.f32.mrb[0].mxu0
        %v331 = vadd.f32 0.0, %v330
        %332 = vmatprep.mubr.bf16.mxu0 0
        %333 = vmatmul.mubr.bf16.gmra.mrb[0].mxu0 %v281
        %v334 = vpop.f32.mrb[0].mxu0
        %v335 = vadd.f32 0.0, %v334
        %v336 = vpop.f32.mrb[0].mxu0
        %v337 = vadd.f32 0.0, %v336
        %v338 = vpop.f32.mrb[0].mxu0
        %v339 = vadd.f32 0.0, %v338
        %v340 = vpop.f32.mrb[0].mxu0
        %v341 = vadd.f32 0.0, %v340
        %342 = vdwg.mxu0
        %v343 = vmul.f32 %v325, 0.5
        %v344 = vmul.f32 %v327, 0.5
        %v345 = vmul.f32 %v329, 0.5
        %v346 = vmul.f32 %v331, 0.5
        %v347 = vmul.f32 %v335, 0.5
        %v348 = vmul.f32 %v337, 0.5
        %v349 = vmul.f32 %v339, 0.5
        %v350 = vmul.f32 %v341, 0.5
        %v351 = vmul.f32 %v325, 0.70710677
        %v352 = vmul.f32 %v327, 0.70710677
        %v353 = vmul.f32 %v329, 0.70710677
        %v354 = vmul.f32 %v331, 0.70710677
        %v355 = vmul.f32 %v335, 0.70710677
        %v356 = vmul.f32 %v337, 0.70710677
        %v357 = vmul.f32 %v339, 0.70710677
        %v358 = vmul.f32 %v341, 0.70710677
        %v359 = verf.f32.pop %v351
        %v360 = verf.f32.pop %v352
        %v361 = verf.f32.pop %v353
        %v362 = verf.f32.pop %v354
        %v363 = verf.f32.pop %v355
        %v364 = verf.f32.pop %v356
        %v365 = verf.f32.pop %v357
        %v366 = verf.f32.pop %v358
        %v367 = vadd.f32 %v359, 1.0
        %v368 = vadd.f32 %v360, 1.0
        %v369 = vadd.f32 %v361, 1.0
        %v370 = vadd.f32 %v362, 1.0
        %v371 = vadd.f32 %v363, 1.0
        %v372 = vadd.f32 %v364, 1.0
        %v373 = vadd.f32 %v365, 1.0
        %v374 = vadd.f32 %v366, 1.0
        %v375 = vmul.f32 %v343, %v367
        %v376 = vmul.f32 %v344, %v368
        %v377 = vmul.f32 %v345, %v369
        %v378 = vmul.f32 %v346, %v370
        %v379 = vmul.f32 %v347, %v371
        %v380 = vmul.f32 %v348, %v372
        %v381 = vmul.f32 %v349, %v373
        %v382 = vmul.f32 %v350, %v374
        %v383 = vld [vmem:[#allocation2] sm:$0xff]
        %v384 = vld [vmem:[%s244] sm:$0x3]
        %v385 = vpack.c.bf16 %v377, %v375
        %v386 = vpack.c.bf16 %v378, %v376
        %v387 = vpack.c.bf16 %v381, %v379
        %v388 = vpack.c.bf16 %v382, %v380
        %vm389 = vcmask 261120
        %v391 = vsel %vm389, %v384, 0
        %393 = vmatprep.subr.bf16.mxu0 %v386
        %394 = vmatpush1.bf16.msra.mxu0 %v385
        %395 = vmatprep.subr.bf16.mxu0 %v388
        %396 = vmatpush1.bf16.msra.mxu0 %v387
        %397 = vmatprep.subr.bf16.mxu0 0
        %398 = vmatpush1.bf16.msra.mxu0 0
        %399 = vmatprep.subr.bf16.mxu0 0
        %400 = vmatpush1.bf16.msra.mxu0 0
        %401 = vmatprep.subr.bf16.mxu0 0
        %402 = vmatpush1.bf16.msra.mxu0 0
        %403 = vmatprep.subr.bf16.mxu0 0
        %404 = vmatpush1.bf16.msra.mxu0 0
        %405 = vmatprep.subr.bf16.mxu0 0
        %406 = vmatpush1.bf16.msra.mxu0 0
        %407 = vmatprep.subr.bf16.mxu0 0
        %408 = vmatpush1.bf16.msra.mxu0 0
        %409 = vmatprep.subr.bf16.mxu0 0
        %410 = vmatpush1.bf16.msra.mxu0 0
        %411 = vmatprep.subr.bf16.mxu0 0
        %412 = vmatpush1.bf16.msra.mxu0 0
        %413 = vmatprep.subr.bf16.mxu0 0
        %414 = vmatpush1.bf16.msra.mxu0 0
        %415 = vmatprep.subr.bf16.mxu0 0
        %416 = vmatpush1.bf16.msra.mxu0 0
        %417 = vmatprep.subr.bf16.mxu0 0
        %418 = vmatpush1.bf16.msra.mxu0 0
        %419 = vmatprep.subr.bf16.mxu0 0
        %420 = vmatpush1.bf16.msra.mxu0 0
        %421 = vmatprep.subr.bf16.mxu0 0
        %422 = vmatpush1.bf16.msra.mxu0 0
        %423 = vmatprep.subr.bf16.mxu0 0
        %424 = vmatpush1.bf16.msra.mxu0 0
        %425 = vmatprep.mubr.bf16.mxu0 0
        %426 = vmatmul.mubr.bf16.gmra.mrb[0].mxu0 %v391
        %v427 = vpop.f32.mrb[0].mxu0
        %v428 = vadd.f32 0.0, %v427
        %v429 = vpop.f32.mrb[0].mxu0
        %v430 = vadd.f32 0.0, %v429
        %v431 = vpop.f32.mrb[0].mxu0
        %v432 = vpop.f32.mrb[0].mxu0
        %433 = vdwg.mxu0
        %v436 = vcombine.low %v428, %v430
        %v438 = vadd.f32 %v383, %v436
        %439 = vst [vmem:[#allocation2] sm:$0xff] %v438
        // Predicated region
        $region37: #{tpu_custom_call.1} parent=31 // pred_check
          %p440 = pneg %p247
        $region38: #{tpu_custom_call.1} parent=31 // pred_check_branch
          %442 = sbr.rel (%p440) target = $region40
        $region39: #{tpu_custom_call.1} parent=31 // pred_region
          %v443 = vld [vmem:[#allocation2] sm:$0xff]
          %444 = vst [vmem:[%s224] sm:$0xff] %v443
        $region40: #{tpu_custom_call.1} parent=31 // pred_fallthru
          _
        %s445 = sand.u32 %s126, 1
        %s446 = scalar_lea.sflag [#allocation4], %s445
        %s447 = sand.u32 %s126, 1
        %s448 = smul.addr %s447, 8
        %s449 = scalar_lea.vmem [#allocation3], %s448
        // Predicated region
        $region41: #{tpu_custom_call.1} parent=31 // pred_check
          %p450 = pneg %p136
        $region42: #{tpu_custom_call.1} parent=31 // pred_check_branch
          %452 = sbr.rel (%p450) target = $region44
        $region43: #{tpu_custom_call.1} parent=31 // pred_region
          %s453 = smul.u32 2, %s23
          %s455 = ssub.s32 128, 128
          %456 = vsyncadd %s446, %s455
          %s457 = smul.addr %s22, 2
          %s458 = sadd.s32 %s453, %s457
          %s459 = smul.addr %s458, 64
          %s460 = scalar_lea.hbm %s3, %s459
          %s462 = sshll.u32 %s449, 4
          %s463 = int_to_ptr.vmem [resolvable:$true] %s462
          %465 = dma.vmem_to_hbm [thread:$0]  %s463, 128, %s460, %s446
        $region44: #{tpu_custom_call.1} parent=31 // pred_fallthru
          _
      $region32: #{tpu_custom_call.1} parent=5 // pred_fallthru
        _
      %p466 = scmp.le.s32.totalorder 2, %s12
      // Predicated region
      $region45: #{tpu_custom_call.1} parent=5 // pred_check
        %p467 = pneg %p466
      $region46: #{tpu_custom_call.1} parent=5 // pred_check_branch
        %469 = sbr.rel (%p467) target = $region48
      $region47: #{tpu_custom_call.1} parent=5 // pred_region
        %s470 = ssub.s32 %s12, 2
        // Predicated region
        $region49: #{tpu_custom_call.1} parent=47 // pred_check
          %p471 = pneg %p142
        $region50: #{tpu_custom_call.1} parent=47 // pred_check_branch
          %473 = sbr.rel (%p471) target = $region52
        $region51: #{tpu_custom_call.1} parent=47 // pred_region
          %s474 = sand.u32 %s127, 1
          %s475 = scalar_lea.sflag [#allocation4], %s474
          %s476 = sand.u32 %s127, 1
          %s477 = smul.addr %s476, 8
          %s478 = scalar_lea.vmem [#allocation3], %s477
          %479 = dma.done %s475, 128
        $region52: #{tpu_custom_call.1} parent=47 // pred_fallthru
          _
      $region48: #{tpu_custom_call.1} parent=5 // pred_fallthru
        _
    $region6: #{tpu_custom_call.1} parent=1 // loop_footer
      %s16 = sadd.s32 1, %s12
    $region7: #{tpu_custom_call.1} parent=1 // loop_footer_branch
      %11 = sbr.rel target = $region3
    $region8: #{tpu_custom_call.1} parent=1 // loop_exit
      _
    %480 = vsyncpa [#allocation4], 1
    %s481 = scalar_lea.sflag [#allocation4], 1
    %482 = vsyncpa %s481, 1

</llo_original>
